<compile_context>
chip_gen: v7x
topology: tpu7x:2x2x1
jax: 0.10.0
libtpu: 0.0.40
codegen_flags: <defaults>
</compile_context>

<pallas_src>
import jax
import jax.numpy as jnp
from jax.experimental import pallas as pl
from jax.experimental.pallas import tpu as pltpu


def _make_yolo_kernel(stride: float):
    """Kernel body. Refs:
       p_ref      : (b_tile, 1, c5, GG)  raw predictions, channel-major, spatial flattened
       grid_ref   : (2, GG)              row 0 = gridX, row 1 = gridY (flattened spatial)
       anchor_ref : (1, 2, 1)            (anchorW, anchorH) / stride for this anchor
       o_ref      : (b_tile, 1, c5, GG)  decoded output (same layout)
    """

    def kernel(p_ref, grid_ref, anchor_ref, o_ref):
        # x, y channels: (sigmoid(p) + grid_offset) * stride
        p_xy = p_ref[:, :, 0:2, :].astype(jnp.float32)           # (b, 1, 2, GG)
        grid = grid_ref[...][None, None]                         # (1, 1, 2, GG)
        o_ref[:, :, 0:2, :] = ((jax.nn.sigmoid(p_xy) + grid) * stride).astype(o_ref.dtype)

        # w, h channels: exp(p) * scaled_anchor * stride   (exp ONLY on these 2 channels)
        p_wh = p_ref[:, :, 2:4, :].astype(jnp.float32)           # (b, 1, 2, GG)
        awh = anchor_ref[...][None] * stride                     # (1, 1, 2, 1)
        o_ref[:, :, 2:4, :] = (jnp.exp(p_wh) * awh).astype(o_ref.dtype)

        # confidence + class channels: sigmoid(p)
        p_rest = p_ref[:, :, 4:, :].astype(jnp.float32)          # (b, 1, c5-4, GG)
        o_ref[:, :, 4:, :] = jax.nn.sigmoid(p_rest).astype(o_ref.dtype)

    return kernel


def yolo_layer_forward(predicts, anchors, num_classes, input_dim):
    """JAX/Pallas equivalent of YoloLayer.forward.

    predicts: (B, A*(5+numClasses), G, G) array (NCHW, like torch).
    returns : (B, A*G*G, 5+numClasses) float32, matching the torch output.
    """
    B, C, G, G2 = predicts.shape
    assert G == G2
    A = len(anchors)
    c5 = 5 + num_classes
    assert C == A * c5, "channel count must equal numAnchors*(5+numClasses)"
    GG = G * G
    stride = input_dim // G  # same integer stride as torch

    # Pure reshape (no transpose, no extra HBM traffic): keep channel-major layout.
    p = predicts.reshape(B, A, c5, GG)

    # Tiny constant side inputs (stay VMEM-resident across the grid).
    k = jnp.arange(GG, dtype=jnp.int32)
    grid_off = jnp.stack([(k % G).astype(jnp.float32),      # gridX[i, j] = j
                          (k // G).astype(jnp.float32)],    # gridY[i, j] = i
                         axis=0)                            # (2, GG)
    anchor_wh = jnp.array([(w / stride, h / stride) for (w, h) in anchors],
                          jnp.float32).reshape(A, 2, 1)     # (A, 2, 1)

    # Block = (b_tile, 1, c5, GG): one anchor, as many batch rows as fit ~2 MiB.
    # With in+out double buffering that is ~8 MiB of VMEM: safe on all chips,
    # big enough that per-step pipeline overhead is negligible.
    bytes_per_batch = c5 * GG * 4
    b_tile = max(1, min(B, (2 * 1024 * 1024) // max(1, bytes_per_batch)))
    while B % b_tile:
        b_tile -= 1
    n_b = B // b_tile

    kernel = _make_yolo_kernel(float(stride))

    n_elems = B * A * c5 * GG
    cost = pl.CostEstimate(
        flops=4 * n_elems,                    # adds/muls around the activations
        transcendentals=n_elems,              # one sigmoid/exp per element
        bytes_accessed=2 * n_elems * predicts.dtype.itemsize
                       + 2 * n_elems * 4,     # read input + write f32 output
    )

    out = pl.pallas_call(
        kernel,
        out_shape=jax.ShapeDtypeStruct((B, A, c5, GG), jnp.float32),
        grid=(A, n_b),  # anchor outermost: anchor table DMA'd once per anchor
        in_specs=[
            pl.BlockSpec((b_tile, 1, c5, GG), lambda a, b: (b, a, 0, 0)),
            pl.BlockSpec((2, GG), lambda a, b: (0, 0)),
            pl.BlockSpec((1, 2, 1), lambda a, b: (a, 0, 0)),
        ],
        out_specs=pl.BlockSpec((b_tile, 1, c5, GG), lambda a, b: (b, a, 0, 0)),
        compiler_params=pltpu.CompilerParams(
            dimension_semantics=("parallel", "parallel")),
        cost_estimate=cost,
    )(p, grid_off, anchor_wh)

    # Single post-kernel transpose to the torch (B, A*G*G, 5+numClasses) layout.
    # (Keeping this outside the kernel preserves lane-dense kernel stores.)
    return jnp.transpose(out, (0, 1, 3, 2)).reshape(B, A * GG, c5)


def _reference_forward(predicts, anchors, num_classes, input_dim):
    """Pure-JAX reference mirroring the torch code, for a sanity check."""
    predicts = predicts.astype(jnp.float32)
    B, C, G, _ = predicts.shape
    A = len(anchors)
    c5 = 5 + num_classes
    stride = input_dim // G
    p = predicts.reshape(B, A, c5, G, G).transpose(0, 1, 3, 4, 2)
    x = jax.nn.sigmoid(p[..., 0])
    y = jax.nn.sigmoid(p[..., 1])
    w = p[..., 2]
    h = p[..., 3]
    conf = jax.nn.sigmoid(p[..., 4])
    cls = jax.nn.sigmoid(p[..., 5:])
    grid_x = jnp.tile(jnp.arange(G, dtype=jnp.float32), (G, 1))[None, None]
    grid_y = grid_x.transpose(0, 1, 3, 2)
    anchor_w = jnp.array([aw / stride for (aw, ah) in anchors], jnp.float32
                         ).reshape(1, A, 1, 1)
    anchor_h = jnp.array([ah / stride for (aw, ah) in anchors], jnp.float32
                         ).reshape(1, A, 1, 1)
    boxes = jnp.stack([x + grid_x, y + grid_y,
                       jnp.exp(w) * anchor_w, jnp.exp(h) * anchor_h], axis=-1)
    return jnp.concatenate(
        [boxes.reshape(B, -1, 4) * stride,
         conf.reshape(B, -1, 1),
         cls.reshape(B, -1, num_classes)], axis=-1)


if __name__ == "__main__":
    # Module "parameters" (fixed deterministically in-script).
    anchors = [(10.0, 13.0), (16.0, 30.0), (33.0, 23.0)]
    num_classes = 3
    input_dim = 64           # -> stride = 4 for a 16x16 grid

    B, G = 2, 16
    A, c5 = len(anchors), 5 + num_classes
    C = A * c5               # 24 channels

    key = jax.random.PRNGKey(0)
    x = jax.random.normal(key, (B, C, G, G), dtype=jnp.float32)

    out = yolo_layer_forward(x, anchors, num_classes, input_dim)
    out = jax.block_until_ready(out)

    ref = _reference_forward(x, anchors, num_classes, input_dim)
    assert out.shape == (B, A * G * G, c5)
    assert jnp.allclose(out, ref, atol=1e-5, rtol=1e-5)

    print("KERNEL_OK")
</pallas_src>

<mosaic_0001>
module attributes {stable_mosaic.version = 11 : i64} {
  func.func @kernel(%arg0: i32, %arg1: i32, %arg2: memref<2x1x8x256xf32, #tpu.memory_space<vmem>>, %arg3: memref<2x256xf32, #tpu.memory_space<vmem>>, %arg4: memref<1x2x1xf32, #tpu.memory_space<vmem>>, %arg5: memref<2x1x8x256xf32, #tpu.memory_space<vmem>>) attributes {dimension_semantics = [#tpu.dimension_semantics<parallel>, #tpu.dimension_semantics<parallel>], iteration_bounds = array<i64: 3, 1>, scalar_prefetch = 0 : i64, scratch_operands = 0 : i64, tpu.core_type = #tpu.core_type<tc>, window_params = [{transform_indices = @transform_0, window_bounds = array<i64: 2, 1, 8, 256>}, {pipeline_mode = #tpu.pipeline_mode<synchronous>, transform_indices = @transform_1, window_bounds = array<i64: 2, 256>}, {transform_indices = @transform_2, window_bounds = array<i64: 1, 2, 1>}, {transform_indices = @transform_3, window_bounds = array<i64: 2, 1, 8, 256>}]} {
    %c0 = arith.constant 0 : index
    %c0_0 = arith.constant 0 : index
    %c0_1 = arith.constant 0 : index
    %c0_2 = arith.constant 0 : index
    %0 = vector.load %arg2[%c0, %c0_0, %c0_1, %c0_2] : memref<2x1x8x256xf32, #tpu.memory_space<vmem>>, vector<2x1x2x256xf32>
    %c0_3 = arith.constant 0 : index
    %c0_4 = arith.constant 0 : index
    %1 = vector.load %arg3[%c0_3, %c0_4] : memref<2x256xf32, #tpu.memory_space<vmem>>, vector<2x256xf32>
    %2 = vector.shape_cast %1 : vector<2x256xf32> to vector<1x1x2x256xf32>
    %3 = arith.negf %0 : vector<2x1x2x256xf32>
    %4 = math.exp %3 : vector<2x1x2x256xf32>
    %cst = arith.constant 1.000000e+00 : f32
    %5 = vector.broadcast %cst : f32 to vector<2x1x2x256xf32>
    %6 = arith.addf %5, %4 : vector<2x1x2x256xf32>
    %7 = arith.divf %5, %6 : vector<2x1x2x256xf32>
    %8 = vector.broadcast %2 : vector<1x1x2x256xf32> to vector<2x1x2x256xf32>
    %9 = arith.addf %7, %8 : vector<2x1x2x256xf32>
    %cst_5 = arith.constant 4.000000e+00 : f32
    %10 = vector.broadcast %cst_5 : f32 to vector<2x1x2x256xf32>
    %11 = arith.mulf %9, %10 : vector<2x1x2x256xf32>
    %c0_6 = arith.constant 0 : index
    %c0_7 = arith.constant 0 : index
    %c0_8 = arith.constant 0 : index
    %c0_9 = arith.constant 0 : index
    %12 = vector.load %arg5[%c0_6, %c0_7, %c0_8, %c0_9] : memref<2x1x8x256xf32, #tpu.memory_space<vmem>>, vector<2x1x2x256xf32>
    tpu.vector_store %arg5[%c0_6, %c0_7, %c0_8, %c0_9], %11 {strides = array<i32>} : memref<2x1x8x256xf32, #tpu.memory_space<vmem>>, vector<2x1x2x256xf32>,
    %c0_10 = arith.constant 0 : index
    %c0_11 = arith.constant 0 : index
    %c2 = arith.constant 2 : index
    %c0_12 = arith.constant 0 : index
    %13 = vector.load %arg2[%c0_10, %c0_11, %c2, %c0_12] : memref<2x1x8x256xf32, #tpu.memory_space<vmem>>, vector<2x1x2x256xf32>
    %c0_13 = arith.constant 0 : index
    %c0_14 = arith.constant 0 : index
    %c0_15 = arith.constant 0 : index
    %14 = vector.load %arg4[%c0_13, %c0_14, %c0_15] : memref<1x2x1xf32, #tpu.memory_space<vmem>>, vector<1x2x1xf32>
    %15 = vector.shape_cast %14 : vector<1x2x1xf32> to vector<1x1x2x1xf32>
    %cst_16 = arith.constant 4.000000e+00 : f32
    %16 = vector.broadcast %cst_16 : f32 to vector<1x1x2x1xf32>
    %17 = arith.mulf %15, %16 : vector<1x1x2x1xf32>
    %18 = math.exp %13 : vector<2x1x2x256xf32>
    %19 = vector.broadcast %17 : vector<1x1x2x1xf32> to vector<2x1x2x256xf32>
    %20 = arith.mulf %18, %19 : vector<2x1x2x256xf32>
    %c0_17 = arith.constant 0 : index
    %c0_18 = arith.constant 0 : index
    %c2_19 = arith.constant 2 : index
    %c0_20 = arith.constant 0 : index
    %21 = vector.load %arg5[%c0_17, %c0_18, %c2_19, %c0_20] : memref<2x1x8x256xf32, #tpu.memory_space<vmem>>, vector<2x1x2x256xf32>
    tpu.vector_store %arg5[%c0_17, %c0_18, %c2_19, %c0_20], %20 {strides = array<i32>} : memref<2x1x8x256xf32, #tpu.memory_space<vmem>>, vector<2x1x2x256xf32>,
    %c0_21 = arith.constant 0 : index
    %c0_22 = arith.constant 0 : index
    %c4 = arith.constant 4 : index
    %c0_23 = arith.constant 0 : index
    %22 = vector.load %arg2[%c0_21, %c0_22, %c4, %c0_23] : memref<2x1x8x256xf32, #tpu.memory_space<vmem>>, vector<2x1x4x256xf32>
    %23 = arith.negf %22 : vector<2x1x4x256xf32>
    %24 = math.exp %23 : vector<2x1x4x256xf32>
    %cst_24 = arith.constant 1.000000e+00 : f32
    %25 = vector.broadcast %cst_24 : f32 to vector<2x1x4x256xf32>
    %26 = arith.addf %25, %24 : vector<2x1x4x256xf32>
    %27 = arith.divf %25, %26 : vector<2x1x4x256xf32>
    %c0_25 = arith.constant 0 : index
    %c0_26 = arith.constant 0 : index
    %c4_27 = arith.constant 4 : index
    %c0_28 = arith.constant 0 : index
    %28 = vector.load %arg5[%c0_25, %c0_26, %c4_27, %c0_28] : memref<2x1x8x256xf32, #tpu.memory_space<vmem>>, vector<2x1x4x256xf32>
    tpu.vector_store %arg5[%c0_25, %c0_26, %c4_27, %c0_28], %27 {strides = array<i32>} : memref<2x1x8x256xf32, #tpu.memory_space<vmem>>, vector<2x1x4x256xf32>,
    return
  }
  func.func @transform_0(%arg0: i32, %arg1: i32) -> (i32, i32, i32, i32) {
    %c0_i32 = arith.constant 0 : i32
    %c0_i32_0 = arith.constant 0 : i32
    %c0_i32_1 = arith.constant 0 : i32
    return %arg1, %arg0, %c0_i32, %c0_i32_0 : i32, i32, i32, i32
  }
  func.func @transform_1(%arg0: i32, %arg1: i32) -> (i32, i32) {
    %c0_i32 = arith.constant 0 : i32
    %c0_i32_0 = arith.constant 0 : i32
    %c0_i32_1 = arith.constant 0 : i32
    return %c0_i32, %c0_i32_0 : i32, i32
  }
  func.func @transform_2(%arg0: i32, %arg1: i32) -> (i32, i32, i32) {
    %c0_i32 = arith.constant 0 : i32
    %c0_i32_0 = arith.constant 0 : i32
    %c0_i32_1 = arith.constant 0 : i32
    return %arg0, %c0_i32, %c0_i32_0 : i32, i32, i32
  }
  func.func @transform_3(%arg0: i32, %arg1: i32) -> (i32, i32, i32, i32) {
    %c0_i32 = arith.constant 0 : i32
    %c0_i32_0 = arith.constant 0 : i32
    %c0_i32_1 = arith.constant 0 : i32
    return %arg1, %arg0, %c0_i32, %c0_i32_0 : i32, i32, i32, i32
  }
}

</mosaic_0001>

<llo_original>
// kernel: tpu_custom_call.1
$region0: #{tpu_custom_call.1}
  #allocation0 [shape = 'u32[]', space=smem, size = 0x4, offset = 0x4, fixed_abs, tag = 'smem constant byte address 0x4 - core index']
  #allocation1 [shape = 'u32[144,128]{1,0:T(1,128)}', space=vmem, size = 0x12000, scoped, tag = 'internal scratch']
  %s0 = inlined_call_operand.hbm [shape: f32[2,3,8,256], index: 0, kind: input, shape index: {}]
  %s1 = inlined_call_operand.vmem [shape: f32[2,256], index: 1, kind: input, shape index: {}]
  %s2 = inlined_call_operand.vmem [shape: f32[3,2,1], index: 2, kind: input, shape index: {}]
  %s3 = inlined_call_operand.hbm [shape: f32[2,3,8,256], index: 3, kind: output, shape index: {}]
  %s4 = sld [smem:[#allocation0]]
  $region49: #{tpu_custom_call.1} parent=0
    _
  %s6 = ssub.s32 1, %s4
  %s7 = scalar_select 0, %s6, %s4
  $region1: #{tpu_custom_call.1} parent=0
    #allocation2 [shape = 'u8[32768]{0}', space=vmem, size = 0x8000, scoped, tag = 'input window, operand 0']
    #allocation3 [shape = 's32[2]{0}', space=sflag, size = 0x8, scoped, tag = 'scoped memory for tpu_custom_call.1']
    #allocation4 [shape = 's32[2]{0}', space=sflag, size = 0x8, scoped, tag = 'scoped memory for tpu_custom_call.1']
    #allocation5 [shape = 'u8[32768]{0}', space=vmem, size = 0x8000, scoped, tag = 'output window, operand 0']
    %8 = vsyncpa [#allocation3], 0
    %s9 = scalar_lea.sflag [#allocation3], 1
    %10 = vsyncpa %s9, 0
    %11 = vsyncpa [#allocation4], 0
    %s12 = scalar_lea.sflag [#allocation4], 1
    %13 = vsyncpa %s12, 0
    loop: start=0, step=1, limit=5
    $region2: #{tpu_custom_call.1} parent=1 // loop_pre_header
      _
    $region3: #{tpu_custom_call.1} parent=1 // loop_header
      %s15 = sphi 0, %s19
      %p16 = scmp.ge.s32.totalorder %s15, 5
      %s22 = sphi 0, %s34
      %s23 = sphi 0, %s30
      %s24 = sphi 0, %s22
      %s25 = sphi 0, %s23
      %s26 = sphi 0, %s24
      %s27 = sphi 0, %s25
      %s39 = sphi 0, %s41
      %s42 = sphi 0, %s39
      %s43 = sphi 0, %s42
      %s59 = sphi 0, %s43
      %s63 = sphi 0, %s63
      %s65 = sphi 0, %s63
      %s66 = sphi 0, %s65
      %s80 = sphi 0, %s66
      %s86 = sphi 0, %s88
      %s89 = sphi 0, %s86
      %s90 = sphi 0, %s89
      %s106 = sphi 0, %s90
      %s114 = sphi 0, %s116
      %s117 = sphi 0, %s114
      %s118 = sphi 0, %s117
      %s134 = sphi 0, %s118
    $region4: #{tpu_custom_call.1} parent=1 // loop_header_branch
      %18 = sbr.rel (%p16) target = $region8
    $region5: #{tpu_custom_call.1} parent=1 // loop_body
      %s20 = ssub.s32 %s15, 1
      %s21 = ssub.s32 %s15, 2
      %s28 = sadd.s32 1, %s23
      %p29 = scmp.ge.s32.totalorder %s28, 1
      %s30 = scalar_select %p29, 0, %s28
      %s31 = sadd.s32 1, %s22
      %s32 = scalar_select %p29, %s31, %s22
      %p33 = scmp.ge.s32.totalorder %s32, 3
      %s34 = scalar_select %p33, 0, %s32
      %s35 = ssub.s32 %s23, %s30
      %s36 = ssub.s32 %s22, %s34
      %s37 = sor.u32 %s35, %s36
      %p38 = scmp.eq.s32.totalorder %s37, 0
      %s40 = sadd.s32 %s39, 1
      %s41 = scalar_select %p38, %s39, %s40
      %p44 = pneg %p38
      %p45 = scmp.eq.s32.totalorder %s15, 2
      %p46 = por %p44, %p45
      %p47 = scmp.ne.s32.totalorder %s39, %s42
      %p48 = scmp.eq.s32.totalorder %s15, 0
      %p49 = por %p47, %p48
      %p50 = scmp.ne.s32.totalorder %s39, %s42
      %p51 = scmp.eq.s32.totalorder %s20, 2
      %p52 = por %p50, %p51
      %p53 = scmp.ne.s32.totalorder %s42, %s43
      %p54 = scmp.eq.s32.totalorder %s20, 0
      %p55 = por %p53, %p54
      %p56 = scmp.ne.s32.totalorder %s42, %s43
      %p57 = scmp.eq.s32.totalorder %s21, 2
      %p58 = por %p56, %p57
      %p60 = scmp.ne.s32.totalorder %s43, %s59
      %p61 = scmp.eq.s32.totalorder %s21, 0
      %p62 = por %p60, %p61
      %s64 = sadd.s32 %s63, 1
      %p67 = scmp.eq.s32.totalorder %s15, 2
      %p68 = scmp.ne.s32.totalorder %s63, %s65
      %p69 = scmp.eq.s32.totalorder %s15, 0
      %p70 = por %p68, %p69
      %p71 = scmp.ne.s32.totalorder %s63, %s65
      %p72 = scmp.eq.s32.totalorder %s20, 2
      %p73 = por %p71, %p72
      %p74 = scmp.ne.s32.totalorder %s65, %s66
      %p75 = scmp.eq.s32.totalorder %s20, 0
      %p76 = por %p74, %p75
      %p77 = scmp.ne.s32.totalorder %s65, %s66
      %p78 = scmp.eq.s32.totalorder %s21, 2
      %p79 = por %p77, %p78
      %p81 = scmp.ne.s32.totalorder %s66, %s80
      %p82 = scmp.eq.s32.totalorder %s21, 0
      %p83 = por %p81, %p82
      %s84 = ssub.s32 %s22, %s34
      %p85 = scmp.eq.s32.totalorder %s84, 0
      %s87 = sadd.s32 %s86, 1
      %s88 = scalar_select %p85, %s86, %s87
      %p91 = pneg %p85
      %p92 = scmp.eq.s32.totalorder %s15, 2
      %p93 = por %p91, %p92
      %p94 = scmp.ne.s32.totalorder %s86, %s89
      %p95 = scmp.eq.s32.totalorder %s15, 0
      %p96 = por %p94, %p95
      %p97 = scmp.ne.s32.totalorder %s86, %s89
      %p98 = scmp.eq.s32.totalorder %s20, 2
      %p99 = por %p97, %p98
      %p100 = scmp.ne.s32.totalorder %s89, %s90
      %p101 = scmp.eq.s32.totalorder %s20, 0
      %p102 = por %p100, %p101
      %p103 = scmp.ne.s32.totalorder %s89, %s90
      %p104 = scmp.eq.s32.totalorder %s21, 2
      %p105 = por %p103, %p104
      %p107 = scmp.ne.s32.totalorder %s90, %s106
      %p108 = scmp.eq.s32.totalorder %s21, 0
      %p109 = por %p107, %p108
      %s110 = ssub.s32 %s23, %s30
      %s111 = ssub.s32 %s22, %s34
      %s112 = sor.u32 %s110, %s111
      %p113 = scmp.eq.s32.totalorder %s112, 0
      %s115 = sadd.s32 %s114, 1
      %s116 = scalar_select %p113, %s114, %s115
      %p119 = pneg %p113
      %p120 = scmp.eq.s32.totalorder %s15, 2
      %p121 = por %p119, %p120
      %p122 = scmp.ne.s32.totalorder %s114, %s117
      %p123 = scmp.eq.s32.totalorder %s15, 0
      %p124 = por %p122, %p123
      %p125 = scmp.ne.s32.totalorder %s114, %s117
      %p126 = scmp.eq.s32.totalorder %s20, 2
      %p127 = por %p125, %p126
      %p128 = scmp.ne.s32.totalorder %s117, %s118
      %p129 = scmp.eq.s32.totalorder %s20, 0
      %p130 = por %p128, %p129
      %p131 = scmp.ne.s32.totalorder %s117, %s118
      %p132 = scmp.eq.s32.totalorder %s21, 2
      %p133 = por %p131, %p132
      %p135 = scmp.ne.s32.totalorder %s118, %s134
      %p136 = scmp.eq.s32.totalorder %s21, 0
      %p137 = por %p135, %p136
      %p138 = scmp.le.s32.totalorder 1, %s15
      %p139 = scmp.lt.s32.totalorder %s15, 4
      %p140 = pnand %p138, %p139
      %p141 = pneg %p140
      // Predicated region
      $region9: #{tpu_custom_call.1} parent=5 // pred_check
        _
      $region10: #{tpu_custom_call.1} parent=5 // pred_check_branch
        %143 = sbr.rel (%p140) target = $region12
      $region11: #{tpu_custom_call.1} parent=5 // pred_region
        %s144 = ssub.s32 %s15, 1
        // Predicated region
        $region13: #{tpu_custom_call.1} parent=11 // pred_check
          %p145 = pneg %p76
        $region14: #{tpu_custom_call.1} parent=11 // pred_check_branch
          %147 = sbr.rel (%p145) target = $region16
        $region15: #{tpu_custom_call.1} parent=11 // pred_region
          _
        $region16: #{tpu_custom_call.1} parent=11 // pred_fallthru
          _
      $region12: #{tpu_custom_call.1} parent=5 // pred_fallthru
        _
      %p148 = scmp.lt.s32.totalorder %s15, 3
      // Predicated region
      $region17: #{tpu_custom_call.1} parent=5 // pred_check
        %p149 = pneg %p148
      $region18: #{tpu_custom_call.1} parent=5 // pred_check_branch
        %151 = sbr.rel (%p149) target = $region20
      $region19: #{tpu_custom_call.1} parent=5 // pred_region
        // Predicated region
        $region21: #{tpu_custom_call.1} parent=19 // pred_check
          %p152 = pneg %p49
        $region22: #{tpu_custom_call.1} parent=19 // pred_check_branch
          %154 = sbr.rel (%p152) target = $region24
        $region23: #{tpu_custom_call.1} parent=19 // pred_region
          %s155 = sand.u32 %s39, 1
          %s156 = scalar_lea.sflag [#allocation3], %s155
          %s157 = sand.u32 %s39, 1
          %s158 = smul.addr %s157, 32
          %s159 = scalar_lea.vmem [#allocation2], %s158
          %s160 = smul.u32 2, %s23
          %s162 = ssub.s32 512, 512
          %163 = vsyncadd %s156, %s162
          %s164 = smul.addr %s22, 2
          %s165 = smul.addr %s160, 6
          %s166 = sadd.s32 %s164, %s165
          %s167 = smul.addr %s166, 128
          %s168 = scalar_lea.hbm %s0, %s167
          %s169 = sshll.u32 %s159, 4
          %s170 = int_to_ptr.vmem [resolvable:$true] %s169
          %175 = dma.hbm_to_vmem [thread:$0]  %s168, 512, %s170, %s156, 768, 256, 16
        $region24: #{tpu_custom_call.1} parent=19 // pred_fallthru
          _
        // Predicated region
        $region25: #{tpu_custom_call.1} parent=19 // pred_check
          %p176 = pneg %p96
        $region26: #{tpu_custom_call.1} parent=19 // pred_check_branch
          %178 = sbr.rel (%p176) target = $region28
        $region27: #{tpu_custom_call.1} parent=19 // pred_region
          %p179 = scmp.lt.s32.totalorder %s22, 2
          %s180 = scalar_select %p179, %s22, 2
          %s181 = smul.addr %s180, 2
          %s182 = scalar_lea.vmem %s2, %s181
        $region28: #{tpu_custom_call.1} parent=19 // pred_fallthru
          _
      $region20: #{tpu_custom_call.1} parent=5 // pred_fallthru
        _
      %p183 = scmp.le.s32.totalorder 1, %s15
      %p184 = scmp.lt.s32.totalorder %s15, 4
      %p185 = pnand %p183, %p184
      %p186 = pneg %p185
      // Predicated region
      $region29: #{tpu_custom_call.1} parent=5 // pred_check
        _
      $region30: #{tpu_custom_call.1} parent=5 // pred_check_branch
        %188 = sbr.rel (%p185) target = $region32
      $region31: #{tpu_custom_call.1} parent=5 // pred_region
        %s189 = ssub.s32 %s15, 1
        %s190 = sand.u32 %s42, 1
        %s191 = scalar_lea.sflag [#allocation3], %s190
        %s192 = sand.u32 %s42, 1
        %s193 = smul.addr %s192, 32
        %s194 = scalar_lea.vmem [#allocation2], %s193
        // Predicated region
        $region33: #{tpu_custom_call.1} parent=31 // pred_check
          %p195 = pneg %p55
        $region34: #{tpu_custom_call.1} parent=31 // pred_check_branch
          %197 = sbr.rel (%p195) target = $region36
        $region35: #{tpu_custom_call.1} parent=31 // pred_region
          %198 = dma.done %s191, 512
        $region36: #{tpu_custom_call.1} parent=31 // pred_fallthru
          _
        %s199 = sand.u32 %s42, 1
        %s200 = scalar_lea.sflag [#allocation3], %s199
        %s201 = sand.u32 %s42, 1
        %s202 = smul.addr %s201, 32
        %s203 = scalar_lea.vmem [#allocation2], %s202
        %p204 = pneg %p55
        %p205 = pneg %p52
        %p206 = pneg %p76
        %p207 = pneg %p73
        %p208 = scmp.lt.s32.totalorder %s24, 2
        %s209 = scalar_select %p208, %s24, 2
        %s210 = smul.addr %s209, 2
        %s211 = scalar_lea.vmem %s2, %s210
        %p212 = pneg %p102
        %p213 = pneg %p99
        %p214 = pneg %p130
        %p215 = pneg %p127
        %s216 = sand.u32 %s117, 1
        %s217 = scalar_lea.sflag [#allocation4], %s216
        %s218 = sand.u32 %s117, 1
        %s219 = smul.addr %s218, 32
        %s220 = scalar_lea.vmem [#allocation5], %s219
        %s221 = smul.u32 2, %s25
        %p222 = scmp.lt.s32.totalorder %s24, 2
        %s223 = scalar_select %p222, %s24, 2
        %s224 = smul.addr %s223, 2
        %s225 = scalar_lea.vmem %s2, %s224
        %s226 = smul.u32 2, %s25
        %v227 = vld [vmem:[%s194] sm:$0x3]
        %v228 = vld [vmem:[%s194 + $0x8] sm:$0x3]
        %v229 = vld [vmem:[%s194 + $0x10] sm:$0x3]
        %v230 = vld [vmem:[%s194 + $0x18] sm:$0x3]
        %v231 = vld [vmem:[%s1] sm:$0xf]
        %v232 = vxor.u32 %v227, 2147483648
        %v233 = vxor.u32 %v228, 2147483648
        %v234 = vxor.u32 %v229, 2147483648
        %v235 = vxor.u32 %v230, 2147483648
        %v236 = vmul.f32 %v232, 1.442695
        %v237 = vpow.pop %v236
        %v238 = vmul.f32 %v233, 1.442695
        %v239 = vpow.pop %v238
        %v240 = vmul.f32 %v234, 1.442695
        %v241 = vpow.pop %v240
        %v242 = vmul.f32 %v235, 1.442695
        %v243 = vpow.pop %v242
        %v244 = vadd.f32 %v237, 1.0
        %v245 = vadd.f32 %v239, 1.0
        %v246 = vadd.f32 %v241, 1.0
        %v247 = vadd.f32 %v243, 1.0
        %v248 = vrcp.pop %v244
        %v249 = vmul.f32 1.0, %v248
        %v250 = vrcp.pop %v245
        %v251 = vmul.f32 1.0, %v250
        %v252 = vrcp.pop %v246
        %v253 = vmul.f32 1.0, %v252
        %v254 = vrcp.pop %v247
        %v255 = vmul.f32 1.0, %v254
        %v258 = vunpack.c.l.s4 1983009808
        %v259 = vunpack.c.0.s8 %v258
        %v260 = vlaneseq
        %v261 = vshrl.u32 %v260, 7
        %v262 = vsub.s32 %v259, %v261
        %v263 = vrot.slane %v231, %v262
        %v264 = vcombine.high %v263, %v263
        %v267 = vadd.f32 %v249, %v263
        %v268 = vadd.f32 %v251, %v264
        %v269 = vadd.f32 %v253, %v263
        %v270 = vadd.f32 %v255, %v264
        %v271 = vmul.f32 %v267, 4.0
        %v272 = vmul.f32 %v268, 4.0
        %v273 = vmul.f32 %v269, 4.0
        %v274 = vmul.f32 %v270, 4.0
        %275 = vst [vmem:[%s220] sm:$0x3] %v271
        %276 = vst [vmem:[%s220 + $0x8] sm:$0x3] %v272
        %277 = vst [vmem:[%s220 + $0x10] sm:$0x3] %v273
        %278 = vst [vmem:[%s220 + $0x18] sm:$0x3] %v274
        %v279 = vld [vmem:[%s194] sm:$0xc]
        %v280 = vld [vmem:[%s194 + $0x8] sm:$0xc]
        %v281 = vld [vmem:[%s194 + $0x10] sm:$0xc]
        %v282 = vld [vmem:[%s194 + $0x18] sm:$0xc]
        %v283 = vld [vmem:[%s225] sm:$0x3]
        %v284 = vmul.f32 %v283, 4.0
        %v285 = vmul.f32 %v279, 1.442695
        %v286 = vpow.pop %v285
        %v287 = vmul.f32 %v280, 1.442695
        %v288 = vpow.pop %v287
        %v289 = vmul.f32 %v281, 1.442695
        %v290 = vpow.pop %v289
        %v291 = vmul.f32 %v282, 1.442695
        %v292 = vpow.pop %v291
        %294 = vset.pattern.permute.xlu0 0
        %295 = vperm.xlu0 %294, %v284
        %v296 = vpop.permute.xlu0 %295
        %v297 = vrot.slane %v296, 6
        %v299 = vmul.f32 %v286, %v297
        %v300 = vmul.f32 %v288, %v297
        %v301 = vmul.f32 %v290, %v297
        %v302 = vmul.f32 %v292, %v297
        %303 = vst [vmem:[%s220] sm:$0xc] %v299
        %304 = vst [vmem:[%s220 + $0x8] sm:$0xc] %v300
        %305 = vst [vmem:[%s220 + $0x10] sm:$0xc] %v301
        %306 = vst [vmem:[%s220 + $0x18] sm:$0xc] %v302
        %v307 = vld [vmem:[%s194] sm:$0xf0]
        %v308 = vld [vmem:[%s194 + $0x8] sm:$0xf0]
        %v309 = vld [vmem:[%s194 + $0x10] sm:$0xf0]
        %v310 = vld [vmem:[%s194 + $0x18] sm:$0xf0]
        %v311 = vxor.u32 %v307, 2147483648
        %v312 = vxor.u32 %v308, 2147483648
        %v313 = vxor.u32 %v309, 2147483648
        %v314 = vxor.u32 %v310, 2147483648
        %v315 = vmul.f32 %v311, 1.442695
        %v316 = vpow.pop %v315
        %v317 = vmul.f32 %v312, 1.442695
        %v318 = vpow.pop %v317
        %v319 = vmul.f32 %v313, 1.442695
        %v320 = vpow.pop %v319
        %v321 = vmul.f32 %v314, 1.442695
        %v322 = vpow.pop %v321
        %v323 = vadd.f32 %v316, 1.0
        %v324 = vadd.f32 %v318, 1.0
        %v325 = vadd.f32 %v320, 1.0
        %v326 = vadd.f32 %v322, 1.0
        %v327 = vrcp.pop %v323
        %v328 = vmul.f32 1.0, %v327
        %v329 = vrcp.pop %v324
        %v330 = vmul.f32 1.0, %v329
        %v331 = vrcp.pop %v325
        %v332 = vmul.f32 1.0, %v331
        %v333 = vrcp.pop %v326
        %v334 = vmul.f32 1.0, %v333
        %335 = vst [vmem:[%s220] sm:$0xf0] %v328
        %336 = vst [vmem:[%s220 + $0x8] sm:$0xf0] %v330
        %337 = vst [vmem:[%s220 + $0x10] sm:$0xf0] %v332
        %338 = vst [vmem:[%s220 + $0x18] sm:$0xf0] %v334
        %s339 = sand.u32 %s117, 1
        %s340 = scalar_lea.sflag [#allocation4], %s339
        %s341 = sand.u32 %s117, 1
        %s342 = smul.addr %s341, 32
        %s343 = scalar_lea.vmem [#allocation5], %s342
        // Predicated region
        $region37: #{tpu_custom_call.1} parent=31 // pred_check
          %p344 = pneg %p127
        $region38: #{tpu_custom_call.1} parent=31 // pred_check_branch
          %346 = sbr.rel (%p344) target = $region40
        $region39: #{tpu_custom_call.1} parent=31 // pred_region
          %s347 = smul.u32 2, %s25
          %s349 = ssub.s32 512, 512
          %350 = vsyncadd %s340, %s349
          %s351 = smul.addr %s24, 2
          %s352 = smul.addr %s347, 6
          %s353 = sadd.s32 %s351, %s352
          %s354 = smul.addr %s353, 128
          %s355 = scalar_lea.hbm %s3, %s354
          %s356 = sshll.u32 %s343, 4
          %s357 = int_to_ptr.vmem [resolvable:$true] %s356
          %362 = dma.vmem_to_hbm [thread:$0]  %s357, 512, %s355, %s340, 256, 768, 16
        $region40: #{tpu_custom_call.1} parent=31 // pred_fallthru
          _
      $region32: #{tpu_custom_call.1} parent=5 // pred_fallthru
        _
      %p363 = scmp.le.s32.totalorder 2, %s15
      // Predicated region
      $region41: #{tpu_custom_call.1} parent=5 // pred_check
        %p364 = pneg %p363
      $region42: #{tpu_custom_call.1} parent=5 // pred_check_branch
        %366 = sbr.rel (%p364) target = $region44
      $region43: #{tpu_custom_call.1} parent=5 // pred_region
        %s367 = ssub.s32 %s15, 2
        // Predicated region
        $region45: #{tpu_custom_call.1} parent=43 // pred_check
          %p368 = pneg %p133
        $region46: #{tpu_custom_call.1} parent=43 // pred_check_branch
          %370 = sbr.rel (%p368) target = $region48
        $region47: #{tpu_custom_call.1} parent=43 // pred_region
          %s371 = sand.u32 %s118, 1
          %s372 = scalar_lea.sflag [#allocation4], %s371
          %s373 = sand.u32 %s118, 1
          %s374 = smul.addr %s373, 32
          %s375 = scalar_lea.vmem [#allocation5], %s374
          %376 = dma.done %s372, 512
        $region48: #{tpu_custom_call.1} parent=43 // pred_fallthru
          _
      $region44: #{tpu_custom_call.1} parent=5 // pred_fallthru
        _
    $region6: #{tpu_custom_call.1} parent=1 // loop_footer
      %s19 = sadd.s32 1, %s15
    $region7: #{tpu_custom_call.1} parent=1 // loop_footer_branch
      %14 = sbr.rel target = $region3
    $region8: #{tpu_custom_call.1} parent=1 // loop_exit
      _
    %377 = vsyncpa [#allocation3], 1
    %s378 = scalar_lea.sflag [#allocation3], 1
    %379 = vsyncpa %s378, 1
    %380 = vsyncpa [#allocation4], 1
    %s381 = scalar_lea.sflag [#allocation4], 1
    %382 = vsyncpa %s381, 1

</llo_original>
